<compile_context>
chip_gen: v7x
topology: tpu7x:2x2x1
jax: 0.10.0
libtpu: 0.0.40
codegen_flags: <defaults>
</compile_context>

<pallas_src>
import math

import jax
import jax.numpy as jnp
from jax.experimental import pallas as pl
from jax.experimental.pallas import tpu as pltpu

_LANE = 128
_BLOCK_TARGET_BYTES = 4 << 20    # ~4 MiB blocks -> ~16 MiB double-buffered in+out
_VMEM_LIMIT_BYTES = 48 << 20     # < v7x 64 MiB physical VMEM; ample on v5e/v6e
_MAX_PACK_LANES = 2048           # target width for the small-C lane-dense repack


# ---------------------------------------------------------------------------
# Kernel body (shared): elementwise multiply with a broadcastable scale block.
#   row variant: x (TR, TW) * s (TR, 1)   -> lane splat
#   col variant: x (TR, TW) * s (1, TW)   -> sublane splat
# ---------------------------------------------------------------------------
def _scale_kernel(x_ref, s_ref, o_ref):
    o_ref[...] = x_ref[...] * s_ref[...]


def _sublane_align(dtype):
    itemsize = jnp.dtype(dtype).itemsize
    return max(8, 32 // max(1, itemsize))


def _pick_tiles(R, W, dtype):
    """~4 MiB blocks: full dims when they fit, otherwise aligned tiles.
    Lane tile up to ~8 KiB worth of lanes (2048 for f32), row tile sized so the
    block lands near the byte target."""
    itemsize = jnp.dtype(dtype).itemsize
    salign = _sublane_align(dtype)
    max_lanes = max(_LANE, ((8192 // itemsize) // _LANE) * _LANE)
    tw = int(W) if W <= max_lanes else max_lanes
    rows_target = max(salign, _BLOCK_TARGET_BYTES // max(1, tw * itemsize))
    if R <= rows_target:
        tr = int(R)
    else:
        tr = int(max(salign, (rows_target // salign) * salign))
    return tr, tw


def _cost(x2, s2):
    nbytes = x2.size * jnp.dtype(x2.dtype).itemsize
    return pl.CostEstimate(
        flops=x2.size,
        transcendentals=0,
        bytes_accessed=2 * nbytes + s2.size * jnp.dtype(s2.dtype).itemsize,
    )


def _compiler_params():
    return pltpu.CompilerParams(
        dimension_semantics=("parallel", "parallel"),
        vmem_limit_bytes=_VMEM_LIMIT_BYTES,
    )


def _scale_rows(x2, s_rows):
    """x2: (R, W) slab, s_rows: (R, 1) per-row scale."""
    R, W = x2.shape
    tr, tw = _pick_tiles(R, W, x2.dtype)
    grid = (pl.cdiv(R, tr), pl.cdiv(W, tw))   # r outer, w inner
    return pl.pallas_call(
        _scale_kernel,
        out_shape=jax.ShapeDtypeStruct((R, W), x2.dtype),
        grid_spec=pltpu.PrefetchScalarGridSpec(
            num_scalar_prefetch=0,
            grid=grid,
            in_specs=[
                pl.BlockSpec((tr, tw), lambda r, w: (r, w)),
                # Block index constant along the inner (w) axis -> no re-DMA.
                pl.BlockSpec((tr, 1), lambda r, w: (r, 0)),
            ],
            out_specs=pl.BlockSpec((tr, tw), lambda r, w: (r, w)),
        ),
        compiler_params=_compiler_params(),
        cost_estimate=_cost(x2, s_rows),
    )(x2, s_rows)


def _scale_cols(x2, s_cols):
    """x2: (R, W) slab, s_cols: (1, W) per-column scale."""
    R, W = x2.shape
    tr, tw = _pick_tiles(R, W, x2.dtype)
    grid = (pl.cdiv(W, tw), pl.cdiv(R, tr))   # w outer, r inner (scale resident)
    return pl.pallas_call(
        _scale_kernel,
        out_shape=jax.ShapeDtypeStruct((R, W), x2.dtype),
        grid_spec=pltpu.PrefetchScalarGridSpec(
            num_scalar_prefetch=0,
            grid=grid,
            in_specs=[
                pl.BlockSpec((tr, tw), lambda w, r: (r, w)),
                # Block index constant along the inner (r) axis -> no re-DMA.
                pl.BlockSpec((1, tw), lambda w, r: (0, w)),
            ],
            out_specs=pl.BlockSpec((tr, tw), lambda w, r: (r, w)),
        ),
        compiler_params=_compiler_params(),
        cost_estimate=_cost(x2, s_cols),
    )(x2, s_cols)


def _best_rep(R, W, base):
    """Largest multiple of `base` that divides R with packed width near
    _MAX_PACK_LANES (not just the minimal lcm)."""
    if R % base != 0:
        return None
    max_k = max(1, _MAX_PACK_LANES // max(1, W * base))
    best = None
    for k in range(1, max_k + 1):
        rep = k * base
        if R % rep == 0:
            best = rep
    return best


def _apply_colscale(x2, s_vec):
    """x2: (R, W); multiply every row elementwise by s_vec (shape (W,))."""
    R, W = x2.shape
    if W % _LANE != 0:
        base = _LANE // math.gcd(W, _LANE)
        rep = _best_rep(R, W, base)
        if rep is not None and rep > 1:
            # Lane-dense repack: (R, W) -> (R/rep, W*rep); pure reshape, no copy.
            L = W * rep
            xp = x2.reshape(R // rep, L)
            sp = jnp.tile(s_vec, rep).reshape(1, L)   # tiny repeated scale row
            return _scale_cols(xp, sp).reshape(R, W)
    # Either W is already lane-dense or the rows don't pack (fallback, still correct).
    return _scale_cols(x2, s_vec.reshape(1, W))


# ---------------------------------------------------------------------------
# Wrapper (the nn.Module forward equivalent)
# ---------------------------------------------------------------------------
def channel_importance_measure(x, scale):
    """Applies per-channel scaling, matching the PyTorch module's forward."""
    if x.ndim == 0:
        raise ValueError("input must have at least 1 dimension")
    out_dtype = jnp.result_type(x.dtype, scale.dtype)   # PyTorch-style promotion
    x = x.astype(out_dtype)
    scale = scale.astype(out_dtype)

    if x.ndim == 5:
        N, C, D, H, W = x.shape
        if C != scale.shape[0]:
            raise ValueError("scale must have num_channels entries")
        S = D * H * W
        if S >= 512 and S % _LANE == 0:
            # Big, lane-dense spatial extent: rows = (n, c), lanes = spatial.
            x2 = x.reshape(N * C, S)
            s_rows = jnp.tile(scale, N).reshape(N * C, 1)  # tiny per-row scale
            return _scale_rows(x2, s_rows).reshape(x.shape)
        # Small / ragged spatial extent: wide (N, C*S) slab, per-column scale.
        x2 = x.reshape(N, C * S)
        s_cols = jnp.repeat(scale, S)                      # tiny (C*S,) scale row
        return _apply_colscale(x2, s_cols).reshape(x.shape)

    # Non-5D path: x * scale.reshape(1, -1) broadcast over the last dim.
    C = scale.shape[0]
    if x.shape[-1] != C:
        raise ValueError("last dim of x must equal num_channels")
    if x.ndim == 1:
        # PyTorch broadcast of (C,) * (1, C) yields a (1, C) result.
        return _apply_colscale(x.reshape(1, C), scale)
    lead = math.prod(x.shape[:-1])
    return _apply_colscale(x.reshape(lead, C), scale).reshape(x.shape)


# ---------------------------------------------------------------------------
# Main
# ---------------------------------------------------------------------------
if __name__ == "__main__":
    key = jax.random.PRNGKey(0)
    k1, k2, k3, k4, k5, k6, k7 = jax.random.split(key, 7)

    num_channels = 4
    # Module init is nn.init.constant_(scale, 1.0); also use a non-trivial
    # scale so the multiply is actually exercised.
    scale_ones = jnp.ones((num_channels,), jnp.float32)
    scale_rand = jax.random.normal(k1, (num_channels,), jnp.float32)

    ok = True

    # 5-D input with small spatial size S=128 -> wide (N, C*S) column path.
    x5 = jax.random.normal(k2, (2, num_channels, 2, 8, 8), jnp.float32)
    y5 = jax.block_until_ready(channel_importance_measure(x5, scale_rand))
    ok &= jnp.allclose(y5, x5 * scale_rand.reshape(1, -1, 1, 1, 1), atol=1e-6)
    y5b = jax.block_until_ready(channel_importance_measure(x5, scale_ones))
    ok &= jnp.allclose(y5b, x5, atol=1e-6)

    # 5-D input with lane-dense S=1024 -> (N*C, S) row path.
    x5c = jax.random.normal(k3, (2, num_channels, 4, 16, 16), jnp.float32)
    y5c = jax.block_until_ready(channel_importance_measure(x5c, scale_rand))
    ok &= jnp.allclose(y5c, x5c * scale_rand.reshape(1, -1, 1, 1, 1), atol=1e-6)

    # 2-D feature input whose rows repack into a lane-dense slab (R % 64 == 0).
    x2 = jax.random.normal(k4, (64, num_channels), jnp.float32)
    y2 = jax.block_until_ready(channel_importance_measure(x2, scale_rand))
    ok &= jnp.allclose(y2, x2 * scale_rand.reshape(1, -1), atol=1e-6)

    # 2-D feature input that does NOT pack (fallback full-C blocks).
    x2b = jax.random.normal(k5, (2, num_channels), jnp.float32)
    y2b = jax.block_until_ready(channel_importance_measure(x2b, scale_rand))
    ok &= jnp.allclose(y2b, x2b * scale_rand.reshape(1, -1), atol=1e-6)

    # 3-D input exercising the generic (..., C) else-branch.
    x3 = jax.random.normal(k6, (2, 8, num_channels), jnp.float32)
    y3 = jax.block_until_ready(channel_importance_measure(x3, scale_rand))
    ok &= jnp.allclose(y3, x3 * scale_rand.reshape(1, -1), atol=1e-6)

    # Mixed precision: bf16 x with f32 scale promotes to an f32 result.
    xbf = jax.random.normal(k7, (8, num_channels), jnp.float32).astype(jnp.bfloat16)
    ybf = jax.block_until_ready(channel_importance_measure(xbf, scale_rand))
    ok &= ybf.dtype == jnp.float32
    ok &= jnp.allclose(ybf, xbf.astype(jnp.float32) * scale_rand.reshape(1, -1),
                       atol=1e-6)

    # 1-D input: PyTorch broadcast yields a (1, C) result.
    x1 = jax.random.normal(k1, (num_channels,), jnp.float32)
    y1 = jax.block_until_ready(channel_importance_measure(x1, scale_rand))
    ok &= y1.shape == (1, num_channels)
    ok &= jnp.allclose(y1, (x1 * scale_rand).reshape(1, -1), atol=1e-6)

    assert bool(ok), "mismatch vs reference"
    print("KERNEL_OK")
</pallas_src>

<mosaic_0001>
module attributes {stable_mosaic.version = 11 : i64} {
  func.func @_scale_kernel(%arg0: i32, %arg1: i32, %arg2: memref<2x512xf32, #tpu.memory_space<vmem>>, %arg3: memref<1x512xf32, #tpu.memory_space<vmem>>, %arg4: memref<2x512xf32, #tpu.memory_space<vmem>>) attributes {dimension_semantics = [#tpu.dimension_semantics<parallel>, #tpu.dimension_semantics<parallel>], iteration_bounds = array<i64: 1, 1>, scalar_prefetch = 0 : i64, scratch_operands = 0 : i64, tpu.core_type = #tpu.core_type<tc>, window_params = [{transform_indices = @transform_0, window_bounds = array<i64: 2, 512>}, {transform_indices = @transform_1, window_bounds = array<i64: 1, 512>}, {transform_indices = @transform_2, window_bounds = array<i64: 2, 512>}]} {
    %c0 = arith.constant 0 : index
    %c0_0 = arith.constant 0 : index
    %0 = vector.load %arg2[%c0, %c0_0] : memref<2x512xf32, #tpu.memory_space<vmem>>, vector<2x512xf32>
    %c0_1 = arith.constant 0 : index
    %c0_2 = arith.constant 0 : index
    %1 = vector.load %arg3[%c0_1, %c0_2] : memref<1x512xf32, #tpu.memory_space<vmem>>, vector<1x512xf32>
    %2 = vector.broadcast %1 : vector<1x512xf32> to vector<2x512xf32>
    %3 = arith.mulf %0, %2 : vector<2x512xf32>
    %c0_3 = arith.constant 0 : index
    %c0_4 = arith.constant 0 : index
    %4 = vector.load %arg4[%c0_3, %c0_4] : memref<2x512xf32, #tpu.memory_space<vmem>>, vector<2x512xf32>
    tpu.vector_store %arg4[%c0_3, %c0_4], %3 {strides = array<i32>} : memref<2x512xf32, #tpu.memory_space<vmem>>, vector<2x512xf32>,
    return
  }
  func.func @transform_0(%arg0: i32, %arg1: i32) -> (i32, i32) {
    %c0_i32 = arith.constant 0 : i32
    return %arg1, %arg0 : i32, i32
  }
  func.func @transform_1(%arg0: i32, %arg1: i32) -> (i32, i32) {
    %c0_i32 = arith.constant 0 : i32
    %c0_i32_0 = arith.constant 0 : i32
    return %c0_i32, %arg0 : i32, i32
  }
  func.func @transform_2(%arg0: i32, %arg1: i32) -> (i32, i32) {
    %c0_i32 = arith.constant 0 : i32
    return %arg1, %arg0 : i32, i32
  }
}

</mosaic_0001>

<llo_original>
// kernel: tpu_custom_call.1
$region0: #{tpu_custom_call.1}
  #allocation0 [shape = 'u32[]', space=smem, size = 0x4, offset = 0x4, fixed_abs, tag = 'smem constant byte address 0x4 - core index']
  #allocation1 [shape = 'u32[144,128]{1,0:T(1,128)}', space=vmem, size = 0x12000, scoped, tag = 'internal scratch']
  %s0 = inlined_call_operand.hbm [shape: f32[2,512], index: 0, kind: input, shape index: {}]
  %s1 = inlined_call_operand.hbm [shape: f32[1,512], index: 1, kind: input, shape index: {}]
  %s2 = inlined_call_operand.hbm [shape: f32[2,512], index: 2, kind: output, shape index: {}]
  %s3 = sld [smem:[#allocation0]]
  $region26: #{tpu_custom_call.1} parent=0
    _
  %s5 = ssub.s32 1, %s3
  %s6 = scalar_select 0, %s5, %s3
  $region1: #{tpu_custom_call.1} parent=0
    #allocation2 [shape = 'u8[4096]{0}', space=vmem, size = 0x1000, scoped, tag = 'input window, operand 0, single buffered']
    #allocation3 [shape = 's32[1]{0}', space=sflag, size = 0x4, scoped, tag = 'scoped memory for tpu_custom_call.1']
    #allocation4 [shape = 's32[1]{0}', space=sflag, size = 0x4, scoped, tag = 'scoped memory for tpu_custom_call.1']
    #allocation5 [shape = 'u8[2048]{0}', space=vmem, size = 0x800, scoped, tag = 'input window, operand 1, single buffered']
    #allocation6 [shape = 's32[1]{0}', space=sflag, size = 0x4, scoped, tag = 'scoped memory for tpu_custom_call.1']
    #allocation7 [shape = 'u8[4096]{0}', space=vmem, size = 0x1000, scoped, tag = 'output window, operand 0, single buffered']
    %7 = vsyncpa [#allocation3], 0
    %8 = vsyncpa [#allocation6], 0
    %9 = vsyncpa [#allocation4], 0
    // Predicated region
    $region2: #{tpu_custom_call.1} parent=1 // pred_check
      _
    $region3: #{tpu_custom_call.1} parent=1 // pred_check_branch
      %11 = sbr.rel (0) target = $region5
    $region4: #{tpu_custom_call.1} parent=1 // pred_region
      %s13 = ssub.s32 128, 128
      %14 = vsyncadd [#allocation3], %s13
      %s16 = sshll.u32 [#allocation2], 4
      %s17 = int_to_ptr.vmem [resolvable:$true] %s16
      %19 = dma.hbm_to_vmem [thread:$0]  %s0, 128, %s17, [#allocation3]
    $region5: #{tpu_custom_call.1} parent=1 // pred_fallthru
      _
    // Predicated region
    $region6: #{tpu_custom_call.1} parent=1 // pred_check
      _
    $region7: #{tpu_custom_call.1} parent=1 // pred_check_branch
      %21 = sbr.rel (0) target = $region9
    $region8: #{tpu_custom_call.1} parent=1 // pred_region
      %s23 = ssub.s32 64, 64
      %24 = vsyncadd [#allocation6], %s23
      %s26 = sshll.u32 [#allocation5], 4
      %s27 = int_to_ptr.vmem [resolvable:$true] %s26
      %29 = dma.hbm_to_vmem [thread:$0]  %s1, 64, %s27, [#allocation6]
    $region9: #{tpu_custom_call.1} parent=1 // pred_fallthru
      _
    // Predicated region
    $region10: #{tpu_custom_call.1} parent=1 // pred_check
      _
    $region11: #{tpu_custom_call.1} parent=1 // pred_check_branch
      %31 = sbr.rel (0) target = $region13
    $region12: #{tpu_custom_call.1} parent=1 // pred_region
      %32 = dma.done [#allocation3], 128
    $region13: #{tpu_custom_call.1} parent=1 // pred_fallthru
      _
    // Predicated region
    $region14: #{tpu_custom_call.1} parent=1 // pred_check
      _
    $region15: #{tpu_custom_call.1} parent=1 // pred_check_branch
      %34 = sbr.rel (0) target = $region17
    $region16: #{tpu_custom_call.1} parent=1 // pred_region
      %35 = dma.done [#allocation6], 64
    $region17: #{tpu_custom_call.1} parent=1 // pred_fallthru
      _
    %v36 = vld [vmem:[#allocation2] sm:$0xff]
    %v37 = vld [vmem:[#allocation5] sm:$0xf]
    %v39 = vlaneseq
    %v40 = vshrl.u32 %v39, 7
    %v41 = vsub.s32 0, %v40
    %v42 = vrot.slane %v37, %v41
    %v43 = vlaneseq
    %v44 = vshrl.u32 %v43, 7
    %v45 = vsub.s32 1, %v44
    %v46 = vrot.slane %v37, %v45
    %v47 = vlaneseq
    %v48 = vshrl.u32 %v47, 7
    %v49 = vsub.s32 2, %v48
    %v50 = vrot.slane %v37, %v49
    %v51 = vlaneseq
    %v52 = vshrl.u32 %v51, 7
    %v53 = vsub.s32 3, %v52
    %v54 = vrot.slane %v37, %v53
    %v55 = vcombine.low %v42, %v46
    %v56 = vcombine.low %v50, %v54
    %v58 = vunpack.c.l.s4 1983009808
    %v59 = vunpack.c.0.s8 %v58
    %v60 = vlaneseq
    %v61 = vshrl.u32 %v60, 7
    %v62 = vsub.s32 %v59, %v61
    %v63 = vrot.slane %v55, %v62
    %v65 = vunpack.c.l.s4 1983009808
    %v66 = vunpack.c.0.s8 %v65
    %v67 = vlaneseq
    %v68 = vshrl.u32 %v67, 7
    %v69 = vsub.s32 %v66, %v68
    %v70 = vrot.slane %v56, %v69
    %v71 = vcombine.low %v63, %v70
    %v73 = vmul.f32 %v36, %v71
    %74 = vst [vmem:[#allocation7] sm:$0xff] %v73
    // Predicated region
    $region18: #{tpu_custom_call.1} parent=1 // pred_check
      _
    $region19: #{tpu_custom_call.1} parent=1 // pred_check_branch
      %76 = sbr.rel (0) target = $region21
    $region20: #{tpu_custom_call.1} parent=1 // pred_region
      %s78 = ssub.s32 128, 128
      %79 = vsyncadd [#allocation4], %s78
      %s81 = sshll.u32 [#allocation7], 4
      %s82 = int_to_ptr.vmem [resolvable:$true] %s81
      %84 = dma.vmem_to_hbm [thread:$0]  %s82, 128, %s2, [#allocation4]
    $region21: #{tpu_custom_call.1} parent=1 // pred_fallthru
      _
    // Predicated region
    $region22: #{tpu_custom_call.1} parent=1 // pred_check
      _
    $region23: #{tpu_custom_call.1} parent=1 // pred_check_branch
      %86 = sbr.rel (0) target = $region25
    $region24: #{tpu_custom_call.1} parent=1 // pred_region
      %87 = dma.done [#allocation4], 128
    $region25: #{tpu_custom_call.1} parent=1 // pred_fallthru
      _
    %88 = vsyncpa [#allocation3], 1
    %89 = vsyncpa [#allocation6], 1
    %90 = vsyncpa [#allocation4], 1

</llo_original>
